<compile_context>
chip_gen: v7x
topology: tpu7x:2x2x1
jax: 0.10.0
libtpu: 0.0.40
codegen_flags: <defaults>
</compile_context>

<pallas_src>
import functools
import math

import jax
import jax.numpy as jnp
from jax import lax
from jax.experimental import pallas as pl
from jax.experimental.pallas import tpu as pltpu


_MIB = 1024 * 1024

# Required multiple of the second-to-last block dim, by element size
# (f32 -> 8, bf16 -> 16, int8/fp8 -> 32).  A block dim that equals the full
# array dim is always legal, which is how small / ragged row counts are tiled
# without padding.
_SUBLANE = {4: 8, 2: 16, 1: 32}


def _cdiv(a, b):
    return (a + b - 1) // b


def _round_up(a, b):
    return _cdiv(a, b) * b


def _tpu_topology():
    """(vmem_capacity_bytes, num_tensorcores), with conservative fallbacks."""
    cap = 64 * _MIB          # assume the smallest generation (v7x: 64 MiB / TC)
    cores = 1
    try:
        info = pltpu.get_tpu_info()
        c = int(getattr(info, "vmem_capacity_bytes", 0) or 0)
        if c > 0:
            cap = c
        for name in ("num_cores", "core_count", "num_tensorcores",
                     "tensorcore_count", "cores_per_chip"):
            v = getattr(info, name, None)
            if v:
                cores = int(v)
                break
    except Exception:
        pass
    if cores == 1:
        try:  # v7x exposes its 2 TCs through the tensorcore mesh
            shp = getattr(pltpu.create_tensorcore_mesh("c"), "shape", None)
            if shp:
                vals = shp.values() if hasattr(shp, "values") else shp
                cores = int(math.prod(int(v) for v in vals))
        except Exception:
            pass
    return cap, max(1, cores)


def _vmem_budget(cap):
    """(vmem_limit_bytes, per-block byte budget), generation aware.

    The per-block budget already includes input double-buffering.  v7x
    (64 MiB/TC, ~3.2 TB/s HBM) gets a larger *fraction* per block: the fixed
    ~0.35 us per-grid-step overhead is a proportionally larger tax there, and
    bigger tiles amortize it.
    """
    vmem_limit = max(32 * _MIB, min(3 * cap // 4, 96 * _MIB))
    if cap <= 80 * _MIB:                  # v7x-class
        block_budget = min(cap // 8, 12 * _MIB)
    else:                                 # v5e / v6e (128 MiB)
        block_budget = min(cap // 12, 16 * _MIB)
    return vmem_limit, max(2 * _MIB, block_budget)


def _pick_row_tile(rows, sub, tm_cap, num_cores):
    """Pick the row-tile size.

    * multiple of `sub` (sublane packing rule) unless it equals the full row
      count (always legal), so no row padding is ever needed,
    * as large as the VMEM budget allows — no forced splitting on 1-TC chips,
    * on multi-TC chips (v7x) the grid-step count is rounded to a multiple of
      the TC count when that does not shrink tiles below `sub`.
    """
    tm_cap = max(sub, (tm_cap // sub) * sub)
    if rows <= tm_cap:
        if num_cores > 1 and rows > sub:
            per = _round_up(_cdiv(rows, num_cores), sub)
            if per < rows:
                return per
        return rows
    tm = tm_cap
    if num_cores > 1:
        steps = _cdiv(rows, tm)
        if steps % num_cores:
            steps = _round_up(steps, num_cores)
            tm = max(sub, _round_up(_cdiv(rows, steps), sub))
    return tm


# --------------------------------------------------------------------------
# Kernels
# --------------------------------------------------------------------------
def _mean_fold_kernel(x_ref, sel_ref, o_ref):
    """Segmented mean over groups of W lanes via a small MXU matmul.

    x_ref:   (tm, k*W)  lane-dense input block, NATIVE dtype (no VPU upcast)
    sel_ref: (k*W, k)   sel[g*W + w, g] = 1/W   (constant block, DMA'd once)
    o_ref:   (tm, k)    per-group means
    """
    x = x_ref[...]
    if x.dtype != sel_ref.dtype:          # integer inputs etc.: compute in f32
        x = x.astype(sel_ref.dtype)
    # bf16 runs the MXU at native rate; 1/W is a power of two so products are
    # exact and the f32 MXU accumulation preserves accuracy.
    # TODO(synk): f32 inputs use default MXU precision (bf16 passes); switch to
    # precision=HIGHEST / a VPU path if bit-parity with jnp.mean ever matters.
    o_ref[...] = jnp.dot(
        x, sel_ref[...], preferred_element_type=jnp.float32
    ).astype(o_ref.dtype)


def _mean_rows_kernel(x_ref, o_ref, *, inv_w):
    """Whole-W-per-block mean: one reduction step per row tile."""
    s = jnp.sum(x_ref[...].astype(jnp.float32), axis=-1, keepdims=True)
    o_ref[...] = (s * inv_w).astype(o_ref.dtype)


def _mean_wtile_kernel(x_ref, o_ref, acc_ref, *, inv_w, w_total, tw, ragged):
    """W-tiled mean with a lane-dense (tm, 128) f32 accumulator.

    Per step only VALU adds over 128-lane-aligned slices touch the
    accumulator; the single cross-lane (XLU) reduction happens once per row
    tile at finalize.  The ragged W tail is masked in-kernel instead of
    padding the whole input in HBM.
    """
    j = pl.program_id(1)

    @pl.when(j == 0)
    def _init():
        acc_ref[...] = jnp.zeros_like(acc_ref)

    x = x_ref[...].astype(jnp.float32)
    if ragged:  # static: only emitted when n_w * tw != W
        col = j * tw + lax.broadcasted_iota(jnp.int32, x.shape, 1)
        x = jnp.where(col < w_total, x, 0.0)

    partial = x[:, 0:128]
    for c in range(1, tw // 128):         # static, 128-lane-aligned slices
        partial = partial + x[:, c * 128:(c + 1) * 128]
    acc_ref[...] += partial

    @pl.when(j == pl.num_programs(1) - 1)
    def _finalize():
        row_sum = jnp.sum(acc_ref[...], axis=-1, keepdims=True)
        o_ref[...] = (row_sum * inv_w).astype(o_ref.dtype)


# --------------------------------------------------------------------------
# Wrapper
# --------------------------------------------------------------------------
def my_avg_pool(x: jax.Array, *, max_w_block: int = 8192) -> jax.Array:
    """Pallas TPU equivalent of `x.mean(dim=-1)` for any rank >= 1 input."""
    if x.ndim < 1:
        raise ValueError("my_avg_pool needs rank >= 1")
    lead = x.shape[:-1]
    W = x.shape[-1]
    R = int(math.prod(lead)) if lead else 1
    x2 = x.reshape(R, W)

    # PyTorch's mean requires / produces floating point; promote ints to f32.
    out_dtype = x.dtype if jnp.issubdtype(x.dtype, jnp.floating) else jnp.float32
    itemsize = x.dtype.itemsize
    sub = _SUBLANE.get(itemsize, 8)
    cap, num_cores = _tpu_topology()
    vmem_limit, block_budget = _vmem_budget(cap)
    # Lane-padded (·, 1)/(·, 128) f32 accumulator + double-buffered output.
    out_bytes_per_row = 3 * 128 * 4

    # ---- Path A: fold k rows into the lane axis so blocks are lane-dense.
    if W < 128 and 128 % W == 0:
        # Largest fold factor k <= 128//W that divides R exactly: the reshape
        # (R, W) -> (R//k, k*W) is then a free contiguous reshape — no jnp.pad
        # copy of the whole tensor for ragged row counts.
        k = 128 // W
        while k > 1 and R % k:
            k -= 1
        if k > 1:
            wf, rf = k * W, R // k
            xf = x2.reshape(rf, wf)
            if x.dtype in (jnp.dtype(jnp.bfloat16), jnp.dtype(jnp.float32)):
                mxu_dtype = x.dtype            # native MXU dtype, no upcast
            else:
                mxu_dtype = jnp.dtype(jnp.float32)
            # Selection matrix: column g sums lanes [g*W, (g+1)*W) * (1/W).
            # 1/W is a power of two -> exact in bf16.
            sel = (jnp.repeat(jnp.eye(k, dtype=jnp.float32), W, axis=0)
                   * (1.0 / W)).astype(mxu_dtype)
            per_elem = 2 * itemsize + (4 if mxu_dtype != x.dtype else 0)
            tm = _pick_row_tile(rf, sub, block_budget // (wf * per_elem),
                                num_cores)
            out = pl.pallas_call(
                _mean_fold_kernel,
                out_shape=jax.ShapeDtypeStruct((rf, k), out_dtype),
                grid_spec=pltpu.PrefetchScalarGridSpec(
                    num_scalar_prefetch=0,
                    grid=(_cdiv(rf, tm),),
                    in_specs=[
                        pl.BlockSpec((tm, wf), lambda i: (i, 0)),
                        pl.BlockSpec((wf, k), lambda i: (0, 0)),  # constant
                    ],
                    out_specs=pl.BlockSpec((tm, k), lambda i: (i, 0)),
                ),
                compiler_params=pltpu.CompilerParams(
                    dimension_semantics=("parallel",),
                    vmem_limit_bytes=vmem_limit,
                ),
            )(xf, sel)
            return out.reshape(lead)
        # k == 1: fall through to the padding-free row-reduction path below.

    # ---- Path B: plain row reduction (W >= 128, or no usable fold).
    # TODO(synk): W < 128 that does not divide 128 (or R with no fold divisor)
    # stays lane-sparse here; it could use a >128-wide fold if it ever matters.
    per_elem = 2 * itemsize + (4 if itemsize < 4 else 0)   # no phantom f32 copy
    if W <= max_w_block:
        # B1: the whole W fits in one block — single reduction step per tile.
        tm = _pick_row_tile(R, sub,
                            block_budget // (W * per_elem + out_bytes_per_row),
                            num_cores)
        out = pl.pallas_call(
            functools.partial(_mean_rows_kernel, inv_w=1.0 / W),
            out_shape=jax.ShapeDtypeStruct((R, 1), out_dtype),
            grid_spec=pltpu.PrefetchScalarGridSpec(
                num_scalar_prefetch=0,
                grid=(_cdiv(R, tm),),
                in_specs=[pl.BlockSpec((tm, W), lambda i: (i, 0))],
                out_specs=pl.BlockSpec((tm, 1), lambda i: (i, 0)),
            ),
            compiler_params=pltpu.CompilerParams(
                dimension_semantics=("parallel",),
                vmem_limit_bytes=vmem_limit,
            ),
        )(x2)
        return out.reshape(lead)

    # B2: W-tiled accumulation — few *wide* W tiles (multi-KiB contiguous
    # DMAs) rather than a divisor search that can collapse to 128-wide strips.
    n_w = _cdiv(W, max_w_block)
    tw = _round_up(_cdiv(W, n_w), 128)
    n_w = _cdiv(W, tw)
    ragged = (n_w * tw != W)              # tail masked in-kernel, no jnp.pad
    tm = _pick_row_tile(R, sub,
                        block_budget // (tw * per_elem + out_bytes_per_row),
                        num_cores)
    out = pl.pallas_call(
        functools.partial(_mean_wtile_kernel, inv_w=1.0 / W, w_total=W,
                          tw=tw, ragged=ragged),
        out_shape=jax.ShapeDtypeStruct((R, 1), out_dtype),
        grid_spec=pltpu.PrefetchScalarGridSpec(
            num_scalar_prefetch=0,
            grid=(_cdiv(R, tm), n_w),
            in_specs=[pl.BlockSpec((tm, tw), lambda i, j: (i, j))],
            out_specs=pl.BlockSpec((tm, 1), lambda i, j: (i, 0)),
            scratch_shapes=[pltpu.VMEM((tm, 128), jnp.float32)],
        ),
        compiler_params=pltpu.CompilerParams(
            dimension_semantics=("parallel", "arbitrary"),
            vmem_limit_bytes=vmem_limit,
        ),
    )(x2)
    return out.reshape(lead)


if __name__ == "__main__":
    key = jax.random.PRNGKey(0)

    # NCHW-style input implied by the module's typical use: (B, C, H, W).
    x = jax.random.normal(key, (2, 4, 16, 16), dtype=jnp.float32)
    # Snap values to bf16-representable f32 so the check does not depend on how
    # the compiler decomposes the f32 segmented-mean matmul on the MXU
    # (products are then exact; accumulation is f32 either way).
    x = x.astype(jnp.bfloat16).astype(jnp.float32)

    out = jax.block_until_ready(my_avg_pool(x))
    ref = jnp.mean(x, axis=-1)
    assert out.shape == ref.shape == (2, 4, 16), out.shape
    assert jnp.allclose(out, ref, atol=1e-5, rtol=1e-5), "fold-path mismatch"

    # bf16 stays bf16 end-to-end on the MXU (no VPU upcast) — native-rate path.
    xb = x.astype(jnp.bfloat16)
    outb = jax.block_until_ready(my_avg_pool(xb))
    refb = jnp.mean(xb.astype(jnp.float32), axis=-1)
    assert outb.dtype == jnp.bfloat16
    assert jnp.allclose(outb.astype(jnp.float32), refb, atol=2e-2, rtol=2e-2), \
        "bf16 fold-path mismatch"

    # Single-W-block row-reduction path (W >= 128, one reduction step).
    x_w = jax.random.normal(jax.random.PRNGKey(1), (2, 3, 512), dtype=jnp.float32)
    ref_w = jnp.mean(x_w, axis=-1)
    out1 = jax.block_until_ready(my_avg_pool(x_w))
    assert out1.shape == (2, 3) and jnp.allclose(out1, ref_w, atol=1e-5, rtol=1e-5), \
        "row-reduction mismatch"

    # W-tiled accumulator path, forced at a small size (grid (1, 2), even tail).
    out2 = jax.block_until_ready(my_avg_pool(x_w, max_w_block=256))
    assert jnp.allclose(out2, ref_w, atol=1e-5, rtol=1e-5), "W-tiled mismatch"

    # W-tiled path with a ragged W tail: in-kernel masking, no jnp.pad copy,
    # and ragged row count (R = 10) handled by partial blocks, not padding.
    x_r = jax.random.normal(jax.random.PRNGKey(2), (2, 5, 300), dtype=jnp.float32)
    out3 = jax.block_until_ready(my_avg_pool(x_r, max_w_block=256))
    ref_r = jnp.mean(x_r, axis=-1)
    assert out3.shape == (2, 5) and jnp.allclose(out3, ref_r, atol=1e-5, rtol=1e-5), \
        "ragged-W mismatch"

    print("KERNEL_OK")
</pallas_src>

<mosaic_0001>
module attributes {stable_mosaic.version = 11 : i64} {
  func.func @_mean_fold_kernel(%arg0: i32, %arg1: memref<16x128xf32, #tpu.memory_space<vmem>>, %arg2: memref<128x8xf32, #tpu.memory_space<vmem>>, %arg3: memref<16x8xf32, #tpu.memory_space<vmem>>) attributes {dimension_semantics = [#tpu.dimension_semantics<parallel>], iteration_bounds = array<i64: 1>, scalar_prefetch = 0 : i64, scratch_operands = 0 : i64, tpu.core_type = #tpu.core_type<tc>, window_params = [{transform_indices = @transform_0, window_bounds = array<i64: 16, 128>}, {pipeline_mode = #tpu.pipeline_mode<synchronous>, transform_indices = @transform_1, window_bounds = array<i64: 128, 8>}, {transform_indices = @transform_2, window_bounds = array<i64: 16, 8>}]} {
    %c0 = arith.constant 0 : index
    %c0_0 = arith.constant 0 : index
    %0 = vector.load %arg1[%c0, %c0_0] : memref<16x128xf32, #tpu.memory_space<vmem>>, vector<16x128xf32>
    %c0_1 = arith.constant 0 : index
    %c0_2 = arith.constant 0 : index
    %1 = vector.load %arg2[%c0_1, %c0_2] : memref<128x8xf32, #tpu.memory_space<vmem>>, vector<128x8xf32>
    %cst = arith.constant dense<0.000000e+00> : vector<16x8xf32>
    %2 = tpu.matmul %0, %1, %cst {dimension_numbers = #tpu.dot_dimension_numbers<[1], [0], [0], [1], [0, 0, 1, 1], [], []>} : vector<16x128xf32>, vector<128x8xf32>, vector<16x8xf32> -> vector<16x8xf32>
    %c0_3 = arith.constant 0 : index
    %c0_4 = arith.constant 0 : index
    %3 = vector.load %arg3[%c0_3, %c0_4] : memref<16x8xf32, #tpu.memory_space<vmem>>, vector<16x8xf32>
    tpu.vector_store %arg3[%c0_3, %c0_4], %2 {strides = array<i32>} : memref<16x8xf32, #tpu.memory_space<vmem>>, vector<16x8xf32>,
    return
  }
  func.func @transform_0(%arg0: i32) -> (i32, i32) {
    %c0_i32 = arith.constant 0 : i32
    %c0_i32_0 = arith.constant 0 : i32
    return %arg0, %c0_i32 : i32, i32
  }
  func.func @transform_1(%arg0: i32) -> (i32, i32) {
    %c0_i32 = arith.constant 0 : i32
    %c0_i32_0 = arith.constant 0 : i32
    %c0_i32_1 = arith.constant 0 : i32
    return %c0_i32, %c0_i32_0 : i32, i32
  }
  func.func @transform_2(%arg0: i32) -> (i32, i32) {
    %c0_i32 = arith.constant 0 : i32
    %c0_i32_0 = arith.constant 0 : i32
    return %arg0, %c0_i32 : i32, i32
  }
}

</mosaic_0001>

<llo_original>
// kernel: tpu_custom_call.1
$region0: #{tpu_custom_call.1}
  #allocation0 [shape = 'u32[]', space=smem, size = 0x4, offset = 0x4, fixed_abs, tag = 'smem constant byte address 0x4 - core index']
  #allocation1 [shape = 'u32[144,128]{1,0:T(1,128)}', space=vmem, size = 0x12000, scoped, tag = 'internal scratch']
  %s0 = inlined_call_operand.vmem [shape: f32[16,128], index: 0, kind: input, shape index: {}]
  %s1 = inlined_call_operand.vmem [shape: f32[128,8], index: 1, kind: input, shape index: {}]
  %s2 = inlined_call_operand.vmem [shape: f32[16,8], index: 2, kind: output, shape index: {}]
  %s3 = sld [smem:[#allocation0]]
  $region18: #{tpu_custom_call.1} parent=0
    _
  %s5 = ssub.s32 1, %s3
  %s6 = scalar_select 0, %s5, %s3
  // Predicated region
  $region2: #{tpu_custom_call.1} parent=0 // pred_check
    _
  $region3: #{tpu_custom_call.1} parent=0 // pred_check_branch
    %8 = sbr.rel (0) target = $region5
  $region4: #{tpu_custom_call.1} parent=0 // pred_region
    _
  $region5: #{tpu_custom_call.1} parent=0 // pred_fallthru
    _
  // Predicated region
  $region6: #{tpu_custom_call.1} parent=0 // pred_check
    _
  $region7: #{tpu_custom_call.1} parent=0 // pred_check_branch
    %10 = sbr.rel (0) target = $region9
  $region8: #{tpu_custom_call.1} parent=0 // pred_region
    _
  $region9: #{tpu_custom_call.1} parent=0 // pred_fallthru
    _
  %v11 = vld [vmem:[%s0] sm:$0xff]
  %v12 = vld [vmem:[%s0 + $0x8] sm:$0xff]
  %v13 = vld [vmem:[%s1] sm:$0xff]
  %v14 = vld [vmem:[%s1 + $0x8] sm:$0xff]
  %v15 = vld [vmem:[%s1 + $0x10] sm:$0xff]
  %v16 = vld [vmem:[%s1 + $0x18] sm:$0xff]
  %v17 = vld [vmem:[%s1 + $0x20] sm:$0xff]
  %v18 = vld [vmem:[%s1 + $0x28] sm:$0xff]
  %v19 = vld [vmem:[%s1 + $0x30] sm:$0xff]
  %v20 = vld [vmem:[%s1 + $0x38] sm:$0xff]
  %v21 = vld [vmem:[%s1 + $0x40] sm:$0xff]
  %v22 = vld [vmem:[%s1 + $0x48] sm:$0xff]
  %v23 = vld [vmem:[%s1 + $0x50] sm:$0xff]
  %v24 = vld [vmem:[%s1 + $0x58] sm:$0xff]
  %v25 = vld [vmem:[%s1 + $0x60] sm:$0xff]
  %v26 = vld [vmem:[%s1 + $0x68] sm:$0xff]
  %v27 = vld [vmem:[%s1 + $0x70] sm:$0xff]
  %v28 = vld [vmem:[%s1 + $0x78] sm:$0xff]
  %29 = vmatprep.subr.mxu0 0.0
  %30 = vmatpush1.msra.mxu0 %v13
  %31 = vmatprep.subr.mxu0 0.0
  %32 = vmatpush1.msra.mxu0 %v14
  %33 = vmatprep.subr.mxu0 0.0
  %34 = vmatpush1.msra.mxu0 %v15
  %35 = vmatprep.subr.mxu0 0.0
  %36 = vmatpush1.msra.mxu0 %v16
  %37 = vmatprep.subr.mxu0 0.0
  %38 = vmatpush1.msra.mxu0 %v17
  %39 = vmatprep.subr.mxu0 0.0
  %40 = vmatpush1.msra.mxu0 %v18
  %41 = vmatprep.subr.mxu0 0.0
  %42 = vmatpush1.msra.mxu0 %v19
  %43 = vmatprep.subr.mxu0 0.0
  %44 = vmatpush1.msra.mxu0 %v20
  %45 = vmatprep.subr.mxu0 0.0
  %46 = vmatpush1.msra.mxu0 %v21
  %47 = vmatprep.subr.mxu0 0.0
  %48 = vmatpush1.msra.mxu0 %v22
  %49 = vmatprep.subr.mxu0 0.0
  %50 = vmatpush1.msra.mxu0 %v23
  %51 = vmatprep.subr.mxu0 0.0
  %52 = vmatpush1.msra.mxu0 %v24
  %53 = vmatprep.subr.mxu0 0.0
  %54 = vmatpush1.msra.mxu0 %v25
  %55 = vmatprep.subr.mxu0 0.0
  %56 = vmatpush1.msra.mxu0 %v26
  %57 = vmatprep.subr.mxu0 0.0
  %58 = vmatpush1.msra.mxu0 %v27
  %59 = vmatprep.subr.mxu0 0.0
  %60 = vmatpush1.msra.mxu0 %v28
  %61 = vmatprep.subr.mxu0 0.0
  %62 = vmatpush1.msra.mxu0 0.0
  %63 = vmatprep.subr.mxu0 0.0
  %64 = vmatpush1.msra.mxu0 0.0
  %65 = vmatprep.subr.mxu0 0.0
  %66 = vmatpush1.msra.mxu0 0.0
  %67 = vmatprep.subr.mxu0 0.0
  %68 = vmatpush1.msra.mxu0 0.0
  %69 = vmatprep.subr.mxu0 0.0
  %70 = vmatpush1.msra.mxu0 0.0
  %71 = vmatprep.subr.mxu0 0.0
  %72 = vmatpush1.msra.mxu0 0.0
  %73 = vmatprep.subr.mxu0 0.0
  %74 = vmatpush1.msra.mxu0 0.0
  %75 = vmatprep.subr.mxu0 0.0
  %76 = vmatpush1.msra.mxu0 0.0
  %77 = vmatprep.subr.mxu0 0.0
  %78 = vmatpush1.msra.mxu0 0.0
  %79 = vmatprep.subr.mxu0 0.0
  %80 = vmatpush1.msra.mxu0 0.0
  %81 = vmatprep.subr.mxu0 0.0
  %82 = vmatpush1.msra.mxu0 0.0
  %83 = vmatprep.subr.mxu0 0.0
  %84 = vmatpush1.msra.mxu0 0.0
  %85 = vmatprep.subr.mxu0 0.0
  %86 = vmatpush1.msra.mxu0 0.0
  %87 = vmatprep.subr.mxu0 0.0
  %88 = vmatpush1.msra.mxu0 0.0
  %89 = vmatprep.subr.mxu0 0.0
  %90 = vmatpush1.msra.mxu0 0.0
  %91 = vmatprep.subr.mxu0 0.0
  %92 = vmatpush1.msra.mxu0 0.0
  %93 = vmatprep.mubr.f32.mxu0 0.0
  %94 = vmatmul.mubr.f32.gmra.mrb[0].mxu0 %v11
  %v95 = vpop.f32.mrb[0].mxu0
  %v96 = vadd.f32 0.0, %v95
  %v97 = vpop.f32.mrb[0].mxu0
  %98 = vmatprep.mubr.f32.mxu0 0.0
  %99 = vmatmul.mubr.f32.gmra.mrb[0].mxu0 %v12
  %v100 = vpop.f32.mrb[0].mxu0
  %v101 = vadd.f32 0.0, %v100
  %v102 = vpop.f32.mrb[0].mxu0
  %103 = vdwg.mxu0
  %vm104 = vcmask 64512
  %105 = vst.msk [vmem:[%s2] sm:$0xff] %vm104, %v96
  %106 = vst.msk [vmem:[%s2 + $0x8] sm:$0xff] %vm104, %v101
  // Predicated region
  $region10: #{tpu_custom_call.1} parent=0 // pred_check
    _
  $region11: #{tpu_custom_call.1} parent=0 // pred_check_branch
    %108 = sbr.rel (0) target = $region13
  $region12: #{tpu_custom_call.1} parent=0 // pred_region
    _
  $region13: #{tpu_custom_call.1} parent=0 // pred_fallthru
    _
  // Predicated region
  $region14: #{tpu_custom_call.1} parent=0 // pred_check
    _
  $region15: #{tpu_custom_call.1} parent=0 // pred_check_branch
    %110 = sbr.rel (0) target = $region17
  $region16: #{tpu_custom_call.1} parent=0 // pred_region
    _
  $region17: #{tpu_custom_call.1} parent=0 // pred_fallthru
    _

</llo_original>
